<compile_context>
chip_gen: v7x
topology: tpu7x:2x2x1
jax: 0.10.0
libtpu: 0.0.40
codegen_flags: <defaults>
</compile_context>

<pallas_src>
import functools

import jax
import jax.numpy as jnp
from jax import lax
from jax.experimental import pallas as pl
from jax.experimental.pallas import tpu as pltpu


def _round_up(x, m):
    return (x + m - 1) // m * m


def _vmem_capacity_bytes():
    """Physical VMEM per core; conservative fallback if the query is unavailable."""
    try:
        return int(pltpu.get_tpu_info().vmem_capacity_bytes)
    except Exception:
        return 64 << 20  # v7x per-TensorCore size (smallest current part)


def _pick_channel_tile(c):
    """Channel tile for a second 'parallel' grid axis (keeps both v7x
    TensorCores busy at small N); degenerates to a single tile for small C."""
    if c >= 16 and c % 16 == 0:
        return c // 2
    return c


def _pick_hw_tile(hw, channels, itemsize, override=None):
    """Lane count per HW tile, sized by bytes (~1-2 MiB embedding block)."""
    if override is not None:
        tile = _round_up(max(int(override), 128), 128)
    else:
        target = (2 << 20) if _vmem_capacity_bytes() >= (100 << 20) else (1 << 20)
        tile = _round_up(max(target // max(channels * itemsize, 1), 128), 128)
    return max(128, min(tile, _round_up(hw, 128)))


def _compiler_params(semantics, *buffer_bytes):
    """vmem_limit from actual (double-buffered) buffer bytes, capped at 75% of
    the physical VMEM of whichever generation we are running on."""
    cap = max((_vmem_capacity_bytes() * 3) // 4, 16 << 20)
    need = 2 * sum(buffer_bytes) + (4 << 20)
    return pltpu.CompilerParams(
        dimension_semantics=semantics,
        vmem_limit_bytes=int(min(max(need, 16 << 20), cap)))


# ----------------------------------------------------------------------------
# Kernels
# ----------------------------------------------------------------------------
def _pool_kernel(emb_ref, mask_ref, out_ref, acc_num, acc_den, *, eps, hw, tile):
    """Masked average pooling over HW.

    grid = (N, C_tiles, HW_tiles); the HW reduction axis is last ('arbitrary'),
    so the (tc, 1) / (1, 1) accumulators stay resident while emb tiles stream.
    """
    k = pl.program_id(2)
    nk = pl.num_programs(2)

    @pl.when(k == 0)
    def _():
        acc_num[...] = jnp.zeros_like(acc_num)
        acc_den[...] = jnp.zeros_like(acc_den)

    # Per-sample mask is resident in VMEM across the K loop; take this step's
    # lane-dense slice (mask is zero-padded, so the denominator stays exact).
    m = mask_ref[0, pl.ds(k, 1), :]                           # (1, tile)
    acc_den[...] += jnp.sum(m.astype(jnp.float32), axis=1, keepdims=True)

    def accum(emb):
        # emb (tc, tile) is the streamed LHS with its contraction (HW) axis on
        # lanes; only the tiny (1, tile) mask is on the transposed-RHS side,
        # so the hot loop stays at the HBM roofline (no C x T transpose).
        acc_num[...] += lax.dot_general(
            emb, m,
            dimension_numbers=(((1,), (1,)), ((), ())),
            preferred_element_type=jnp.float32)

    num_full = hw // tile
    rem = hw - num_full * tile
    if rem == 0:
        accum(emb_ref[0])
    else:
        # The embedding is NOT padded in HBM; the ragged tail block is masked
        # in-kernel (jnp.where with an iota lane mask -- OOB lanes may be NaN).
        def masked_tail():
            e = emb_ref[0]
            lane = lax.broadcasted_iota(jnp.int32, e.shape, 1)
            return jnp.where(lane < rem, e, jnp.zeros_like(e))

        if num_full == 0:
            accum(masked_tail())
        else:
            @pl.when(k < num_full)
            def _():
                accum(emb_ref[0])

            @pl.when(k == num_full)
            def _():
                accum(masked_tail())

    @pl.when(k == nk - 1)
    def _():
        # Exact divide: runs once per (sample, channel tile); accuracy is free.
        out_ref[0] = (acc_num[...] / (acc_den[...] + eps)).astype(out_ref.dtype)


def _mask_mul_kernel(emb_ref, mask_ref, out_ref):
    """pooling=False path: tiled elementwise mask * embedding."""
    out_ref[...] = emb_ref[...].astype(out_ref.dtype) * mask_ref[...]


# ----------------------------------------------------------------------------
# Glue
# ----------------------------------------------------------------------------
def _nearest_resize_mask(mask, h, w):
    """F.interpolate(mask[:, None].float(), size=(h, w), mode='nearest')."""
    # TODO(synk): nearest-neighbor resize is index-gather glue; kept in plain
    # JAX/XLA rather than a Pallas kernel.
    n, hm, wm = mask.shape
    ih = (jnp.arange(h) * hm) // h
    iw = (jnp.arange(w) * wm) // w
    return mask[:, ih[:, None], iw[None, :]].astype(jnp.float32)


def masked_average_pooling(embedding, mask, weight=None, bias=None,
                           pooling=True, eps=0.001, hw_tile=None):
    """JAX/Pallas equivalent of MaskedAveragePooling.forward.

    embedding: (N, C, H, W), streamed in its native dtype (no f32 upcast copy)
    mask:      (N, Hm, Wm), nearest-resized to (H, W)
    weight:    (C, C, 1, 1) 1x1-conv weight or None (no projection)
    bias:      (C,)
    pooling:   True -> (N, C, 1, 1); False -> (N, C, H, W) masked embedding
    hw_tile:   optional lane-count override for the HW tile (else byte-sized)
    """
    n, c, h, w = embedding.shape
    hw = h * w
    itemsize = jnp.dtype(embedding.dtype).itemsize

    emb_flat = embedding.reshape(n, c, hw)              # free reshape, native dtype
    mask_r = _nearest_resize_mask(mask, h, w)           # (N, H, W) f32

    if not pooling:
        # Elementwise path: no padding, no post-slice; the ragged tail block is
        # handled by Pallas' masked partial stores on the output.
        out_dtype = jnp.promote_types(embedding.dtype, jnp.float32)
        tile = _pick_hw_tile(hw, c, max(itemsize, 4), hw_tile)
        num_k = pl.cdiv(hw, tile)
        mask_flat = mask_r.reshape(n, 1, hw)
        out = pl.pallas_call(
            _mask_mul_kernel,
            out_shape=jax.ShapeDtypeStruct((n, c, hw), out_dtype),
            grid_spec=pltpu.PrefetchScalarGridSpec(
                num_scalar_prefetch=0,
                grid=(n, num_k),
                in_specs=[pl.BlockSpec((1, c, tile), lambda i, k: (i, 0, k)),
                          pl.BlockSpec((1, 1, tile), lambda i, k: (i, 0, k))],
                out_specs=pl.BlockSpec((1, c, tile), lambda i, k: (i, 0, k))),
            compiler_params=_compiler_params(
                ("parallel", "parallel"),
                c * tile * itemsize, tile * 4, c * tile * 4),
        )(emb_flat, mask_flat)
        return out.reshape(n, c, h, w)

    # ---- pooling path ----
    tc = _pick_channel_tile(c)
    n_ct = c // tc
    tile = _pick_hw_tile(hw, tc, itemsize, hw_tile)
    num_k = pl.cdiv(hw, tile)
    hwp = num_k * tile

    # The mask is C x smaller than the embedding: cast to the embedding dtype
    # (0/1 is exact) and zero-pad only its tail; the embedding itself is neither
    # padded nor upcast (no extra HBM passes over the large tensor).
    mask_flat = mask_r.reshape(n, 1, hw).astype(embedding.dtype)
    if hwp != hw:
        mask_flat = jnp.pad(mask_flat, ((0, 0), (0, 0), (0, hwp - hw)))
    mask_tiles = mask_flat.reshape(n, num_k, tile)       # resident per sample

    proto = pl.pallas_call(
        functools.partial(_pool_kernel, eps=float(eps), hw=hw, tile=tile),
        out_shape=jax.ShapeDtypeStruct((n, c, 1), jnp.float32),
        grid_spec=pltpu.PrefetchScalarGridSpec(
            num_scalar_prefetch=0,
            grid=(n, n_ct, num_k),
            in_specs=[pl.BlockSpec((1, tc, tile), lambda i, j, k: (i, j, k)),
                      pl.BlockSpec((1, num_k, tile), lambda i, j, k: (i, 0, 0))],
            out_specs=pl.BlockSpec((1, tc, 1), lambda i, j, k: (i, j, 0)),
            scratch_shapes=[pltpu.VMEM((tc, 1), jnp.float32),   # numerator
                            pltpu.VMEM((1, 1), jnp.float32)]),  # denominator
        compiler_params=_compiler_params(
            ("parallel", "parallel", "arbitrary"),
            tc * tile * itemsize,        # streamed emb block
            num_k * tile * itemsize,     # resident per-sample mask
            tc * 4),                     # output block / accumulators
    )(emb_flat, mask_tiles)

    proto = proto.reshape(n, c)
    if weight is not None:
        # 1x1-conv projection hoisted out of the reduction kernel (perf review):
        # one batched (N, C) @ (C, C) matmul pushes the weights once with M=N
        # and keeps the C x C weight out of the pooling kernel's VMEM budget.
        wmat = weight.reshape(c, c).astype(jnp.float32)
        proto = proto @ wmat.T + bias.reshape(1, c).astype(jnp.float32)
    return proto.reshape(n, c, 1, 1)


# ----------------------------------------------------------------------------
# Reference (pure JAX) for verification
# ----------------------------------------------------------------------------
def _reference(embedding, mask, weight, bias, pooling=True, eps=0.001):
    n, c, h, w = embedding.shape
    m = _nearest_resize_mask(mask, h, w)[:, None, :, :]          # (N,1,H,W)
    emb = embedding.astype(jnp.float32)
    if not pooling:
        return m * emb
    num = jnp.sum(m * emb, axis=(2, 3), keepdims=True)           # (N,C,1,1)
    den = jnp.sum(m, axis=(2, 3), keepdims=True)                 # (N,1,1,1)
    proto = num / (den + eps)
    if weight is None:
        return proto
    wmat = weight.reshape(c, c).astype(jnp.float32)
    return jnp.einsum('oc,ncij->noij', wmat, proto) + bias.reshape(1, c, 1, 1)


# ----------------------------------------------------------------------------
if __name__ == "__main__":
    key = jax.random.PRNGKey(0)
    keys = jax.random.split(key, 8)

    # Small shapes consistent with the module: N=2, C=4, spatial 16x16, mask 8x8.
    N, C, H, W = 2, 4, 16, 16
    Hm, Wm = 8, 8

    embedding = jax.random.normal(keys[0], (N, C, H, W), dtype=jnp.float32)
    mask = (jax.random.uniform(keys[1], (N, Hm, Wm)) > 0.5).astype(jnp.float32)
    weight = 0.1 * jax.random.normal(keys[2], (C, C, 1, 1), dtype=jnp.float32)
    bias = 0.1 * jax.random.normal(keys[3], (C,), dtype=jnp.float32)

    # 1) pooling=True + 1x1-conv projection (hw_tile=128 -> 2 reduction steps).
    out = jax.block_until_ready(
        masked_average_pooling(embedding, mask, weight, bias,
                               pooling=True, hw_tile=128))
    ref = _reference(embedding, mask, weight, bias, pooling=True)
    assert out.shape == (N, C, 1, 1)
    assert jnp.allclose(out, ref, atol=2e-3, rtol=2e-3)

    # 2) pooling=True, no projection, automatic byte-sized HW tile.
    out = jax.block_until_ready(
        masked_average_pooling(embedding, mask, None, None, pooling=True))
    ref = _reference(embedding, mask, None, None, pooling=True)
    assert out.shape == (N, C, 1, 1)
    assert jnp.allclose(out, ref, atol=2e-3, rtol=2e-3)

    # 3) pooling=False (tiled elementwise mask * embedding, no pad / no slice).
    out = jax.block_until_ready(
        masked_average_pooling(embedding, mask, weight, bias,
                               pooling=False, hw_tile=128))
    ref = _reference(embedding, mask, weight, bias, pooling=False)
    assert out.shape == (N, C, H, W)
    assert jnp.allclose(out, ref, atol=1e-5, rtol=1e-5)

    # 4) Ragged HW (20x20 = 3 full 128-lane tiles + 16-lane tail), channel
    #    tiling (C=32 -> two parallel c-tiles) and mask up-sampling (10x10->20x20).
    C2, H2, W2 = 32, 20, 20
    emb2 = jax.random.normal(keys[4], (N, C2, H2, W2), dtype=jnp.float32)
    mask2 = (jax.random.uniform(keys[5], (N, 10, 10)) > 0.5).astype(jnp.float32)
    w2 = 0.1 * jax.random.normal(keys[6], (C2, C2, 1, 1), dtype=jnp.float32)
    b2 = 0.1 * jax.random.normal(keys[7], (C2,), dtype=jnp.float32)

    out = jax.block_until_ready(
        masked_average_pooling(emb2, mask2, w2, b2, pooling=True, hw_tile=128))
    ref = _reference(emb2, mask2, w2, b2, pooling=True)
    assert out.shape == (N, C2, 1, 1)
    assert jnp.allclose(out, ref, atol=2e-3, rtol=2e-3)

    out = jax.block_until_ready(
        masked_average_pooling(emb2, mask2, w2, b2, pooling=False, hw_tile=128))
    ref = _reference(emb2, mask2, w2, b2, pooling=False)
    assert out.shape == (N, C2, H2, W2)
    assert jnp.allclose(out, ref, atol=1e-5, rtol=1e-5)

    # 5) Native bf16 streaming (no f32 upcast copy of the embedding in HBM).
    emb_bf16 = embedding.astype(jnp.bfloat16)
    out = jax.block_until_ready(
        masked_average_pooling(emb_bf16, mask, weight, bias,
                               pooling=True, hw_tile=128))
    ref = _reference(emb_bf16, mask, weight, bias, pooling=True)
    assert out.shape == (N, C, 1, 1)
    assert jnp.allclose(out, ref, atol=5e-3, rtol=5e-3)

    print("KERNEL_OK")
</pallas_src>

<mosaic_0001>
module attributes {stable_mosaic.version = 11 : i64} {
  func.func @_pool_kernel(%arg0: i32, %arg1: i32, %arg2: i32, %arg3: memref<1x4x128xf32, #tpu.memory_space<vmem>>, %arg4: memref<1x2x128xf32, #tpu.memory_space<vmem>>, %arg5: memref<1x4x1xf32, #tpu.memory_space<vmem>>, %arg6: memref<4x1xf32, #tpu.memory_space<vmem>>, %arg7: memref<1x1xf32, #tpu.memory_space<vmem>>) attributes {dimension_semantics = [#tpu.dimension_semantics<parallel>, #tpu.dimension_semantics<parallel>, #tpu.dimension_semantics<arbitrary>], iteration_bounds = array<i64: 2, 1, 2>, scalar_prefetch = 0 : i64, scratch_operands = 2 : i64, tpu.core_type = #tpu.core_type<tc>, window_params = [{transform_indices = @transform_0, window_bounds = array<i64: 1, 4, 128>}, {transform_indices = @transform_1, window_bounds = array<i64: 1, 2, 128>}, {transform_indices = @transform_2, window_bounds = array<i64: 1, 4, 1>}]} {
    %c0_i32 = arith.constant 0 : i32
    %0 = arith.cmpi eq, %arg2, %c0_i32 : i32
    %1 = arith.extui %0 : i1 to i32
    %c0_i32_0 = arith.constant 0 : i32
    %2 = arith.cmpi ne, %1, %c0_i32_0 : i32
    scf.if %2 {
      %cst_15 = arith.constant 0.000000e+00 : f32
      %20 = vector.broadcast %cst_15 : f32 to vector<4x1xf32>
      %c0_16 = arith.constant 0 : index
      %c0_17 = arith.constant 0 : index
      %21 = vector.load %arg6[%c0_16, %c0_17] : memref<4x1xf32, #tpu.memory_space<vmem>>, vector<4x1xf32>
      tpu.vector_store %arg6[%c0_16, %c0_17], %20 {strides = array<i32>} : memref<4x1xf32, #tpu.memory_space<vmem>>, vector<4x1xf32>,
      %cst_18 = arith.constant 0.000000e+00 : f32
      %22 = vector.broadcast %cst_18 : f32 to vector<1x1xf32>
      %c0_19 = arith.constant 0 : index
      %c0_20 = arith.constant 0 : index
      %23 = vector.load %arg7[%c0_19, %c0_20] : memref<1x1xf32, #tpu.memory_space<vmem>>, vector<1x1xf32>
      tpu.vector_store %arg7[%c0_19, %c0_20], %22 {strides = array<i32>} : memref<1x1xf32, #tpu.memory_space<vmem>>, vector<1x1xf32>,
    } else {
    }
    %c0 = arith.constant 0 : index
    %3 = arith.index_cast %arg2 : i32 to index
    %c0_1 = arith.constant 0 : index
    %4 = vector.load %arg4[%c0, %3, %c0_1] : memref<1x2x128xf32, #tpu.memory_space<vmem>>, vector<1x1x128xf32>
    %5 = vector.shape_cast %4 : vector<1x1x128xf32> to vector<1x128xf32>
    %c0_2 = arith.constant 0 : index
    %c0_3 = arith.constant 0 : index
    %6 = vector.load %arg7[%c0_2, %c0_3] : memref<1x1xf32, #tpu.memory_space<vmem>>, vector<1x1xf32>
    %cst = arith.constant dense<0.000000e+00> : vector<1xf32>
    %7 = vector.multi_reduction <add>, %5, %cst [1] : vector<1x128xf32> to vector<1xf32>
    %8 = vector.shape_cast %7 : vector<1xf32> to vector<1x1xf32>
    %9 = arith.addf %6, %8 : vector<1x1xf32>
    %c0_4 = arith.constant 0 : index
    %c0_5 = arith.constant 0 : index
    %10 = vector.load %arg7[%c0_4, %c0_5] : memref<1x1xf32, #tpu.memory_space<vmem>>, vector<1x1xf32>
    tpu.vector_store %arg7[%c0_4, %c0_5], %9 {strides = array<i32>} : memref<1x1xf32, #tpu.memory_space<vmem>>, vector<1x1xf32>,
    %c0_6 = arith.constant 0 : index
    %c0_7 = arith.constant 0 : index
    %c0_8 = arith.constant 0 : index
    %11 = vector.load %arg3[%c0_6, %c0_7, %c0_8] : memref<1x4x128xf32, #tpu.memory_space<vmem>>, vector<1x4x128xf32>
    %12 = vector.shape_cast %11 : vector<1x4x128xf32> to vector<4x128xf32>
    %c0_9 = arith.constant 0 : index
    %c0_10 = arith.constant 0 : index
    %13 = vector.load %arg6[%c0_9, %c0_10] : memref<4x1xf32, #tpu.memory_space<vmem>>, vector<4x1xf32>
    %cst_11 = arith.constant dense<0.000000e+00> : vector<4x1xf32>
    %14 = tpu.matmul %12, %5, %cst_11 {dimension_numbers = #tpu.dot_dimension_numbers<[1], [1], [0], [0], [0, 0, 1, 0], [], []>} : vector<4x128xf32>, vector<1x128xf32>, vector<4x1xf32> -> vector<4x1xf32>
    %15 = arith.addf %13, %14 : vector<4x1xf32>
    %c0_12 = arith.constant 0 : index
    %c0_13 = arith.constant 0 : index
    %16 = vector.load %arg6[%c0_12, %c0_13] : memref<4x1xf32, #tpu.memory_space<vmem>>, vector<4x1xf32>
    tpu.vector_store %arg6[%c0_12, %c0_13], %15 {strides = array<i32>} : memref<4x1xf32, #tpu.memory_space<vmem>>, vector<4x1xf32>,
    %c1_i32 = arith.constant 1 : i32
    %17 = arith.cmpi eq, %arg2, %c1_i32 : i32
    %18 = arith.extui %17 : i1 to i32
    %c0_i32_14 = arith.constant 0 : i32
    %19 = arith.cmpi ne, %18, %c0_i32_14 : i32
    scf.if %19 {
      %c0_15 = arith.constant 0 : index
      %c0_16 = arith.constant 0 : index
      %20 = vector.load %arg6[%c0_15, %c0_16] : memref<4x1xf32, #tpu.memory_space<vmem>>, vector<4x1xf32>
      %c0_17 = arith.constant 0 : index
      %c0_18 = arith.constant 0 : index
      %21 = vector.load %arg7[%c0_17, %c0_18] : memref<1x1xf32, #tpu.memory_space<vmem>>, vector<1x1xf32>
      %cst_19 = arith.constant 1.000000e-03 : f32
      %22 = vector.broadcast %cst_19 : f32 to vector<1x1xf32>
      %23 = arith.addf %21, %22 : vector<1x1xf32>
      %24 = vector.broadcast %23 : vector<1x1xf32> to vector<4x1xf32>
      %25 = arith.divf %20, %24 : vector<4x1xf32>
      %c0_20 = arith.constant 0 : index
      %c0_21 = arith.constant 0 : index
      %c0_22 = arith.constant 0 : index
      %26 = vector.load %arg5[%c0_20, %c0_21, %c0_22] : memref<1x4x1xf32, #tpu.memory_space<vmem>>, vector<1x4x1xf32>
      %27 = vector.shape_cast %26 : vector<1x4x1xf32> to vector<4x1xf32>
      %28 = vector.shape_cast %25 : vector<4x1xf32> to vector<1x4x1xf32>
      tpu.vector_store %arg5[%c0_20, %c0_21, %c0_22], %28 {strides = array<i32>} : memref<1x4x1xf32, #tpu.memory_space<vmem>>, vector<1x4x1xf32>,
    } else {
    }
    return
  }
  func.func @transform_0(%arg0: i32, %arg1: i32, %arg2: i32) -> (i32, i32, i32) {
    %c0_i32 = arith.constant 0 : i32
    return %arg0, %arg1, %arg2 : i32, i32, i32
  }
  func.func @transform_1(%arg0: i32, %arg1: i32, %arg2: i32) -> (i32, i32, i32) {
    %c0_i32 = arith.constant 0 : i32
    %c0_i32_0 = arith.constant 0 : i32
    %c0_i32_1 = arith.constant 0 : i32
    return %arg0, %c0_i32, %c0_i32_0 : i32, i32, i32
  }
  func.func @transform_2(%arg0: i32, %arg1: i32, %arg2: i32) -> (i32, i32, i32) {
    %c0_i32 = arith.constant 0 : i32
    %c0_i32_0 = arith.constant 0 : i32
    return %arg0, %arg1, %c0_i32 : i32, i32, i32
  }
}

</mosaic_0001>

<llo_original>
// kernel: tpu_custom_call.1
$region0: #{tpu_custom_call.1}
  #allocation0 [shape = 'u32[]', space=smem, size = 0x4, offset = 0x4, fixed_abs, tag = 'smem constant byte address 0x4 - core index']
  #allocation1 [shape = 'u32[144,128]{1,0:T(1,128)}', space=vmem, size = 0x12000, scoped, tag = 'internal scratch']
  #allocation2 [shape = 'f32[4,1]{1,0:T(4,128)}', space=vmem, size = 0x800, scoped, tag = 'scratch operand']
  #allocation3 [shape = 'f32[1,1]{1,0:T(1,128)}', space=vmem, size = 0x200, scoped, tag = 'scratch operand']
  %s0 = inlined_call_operand.hbm [shape: f32[2,4,256], index: 0, kind: input, shape index: {}]
  %s1 = inlined_call_operand.hbm [shape: f32[2,2,128], index: 1, kind: input, shape index: {}]
  %s2 = inlined_call_operand.vmem [shape: f32[2,4,1], index: 2, kind: output, shape index: {}]
  %s3 = sld [smem:[#allocation0]]
  $region57: #{tpu_custom_call.1} parent=0
    _
  %s5 = ssub.s32 1, %s3
  %s6 = scalar_select 0, %s5, %s3
  $region1: #{tpu_custom_call.1} parent=0
    #allocation4 [shape = 'u8[4096]{0}', space=vmem, size = 0x1000, scoped, tag = 'input window, operand 0']
    #allocation5 [shape = 's32[2]{0}', space=sflag, size = 0x8, scoped, tag = 'scoped memory for tpu_custom_call.1']
    #allocation6 [shape = 'u8[2048]{0}', space=vmem, size = 0x800, scoped, tag = 'input window, operand 1']
    #allocation7 [shape = 's32[2]{0}', space=sflag, size = 0x8, scoped, tag = 'scoped memory for tpu_custom_call.1']
    %7 = vsyncpa [#allocation5], 0
    %s8 = scalar_lea.sflag [#allocation5], 1
    %9 = vsyncpa %s8, 0
    %10 = vsyncpa [#allocation7], 0
    %s11 = scalar_lea.sflag [#allocation7], 1
    %12 = vsyncpa %s11, 0
    loop: start=0, step=1, limit=6
    $region2: #{tpu_custom_call.1} parent=1 // loop_pre_header
      _
    $region3: #{tpu_custom_call.1} parent=1 // loop_header
      %s14 = sphi 0, %s18
      %p15 = scmp.ge.s32.totalorder %s14, 6
      %s21 = sphi 0, %s40
      %s22 = sphi 0, %s36
      %s23 = sphi 0, %s32
      %s24 = sphi 0, %s21
      %s25 = sphi 0, %s22
      %s26 = sphi 0, %s23
      %s27 = sphi 0, %s24
      %s28 = sphi 0, %s25
      %s29 = sphi 0, %s26
      %s47 = sphi 0, %s49
      %s50 = sphi 0, %s47
      %s51 = sphi 0, %s50
      %s67 = sphi 0, %s51
      %s73 = sphi 0, %s75
      %s76 = sphi 0, %s73
      %s77 = sphi 0, %s76
      %s93 = sphi 0, %s77
      %s101 = sphi 0, %s103
      %s104 = sphi 0, %s101
      %s105 = sphi 0, %s104
      %s121 = sphi 0, %s105
    $region4: #{tpu_custom_call.1} parent=1 // loop_header_branch
      %17 = sbr.rel (%p15) target = $region8
    $region5: #{tpu_custom_call.1} parent=1 // loop_body
      %s19 = ssub.s32 %s14, 1
      %s20 = ssub.s32 %s14, 2
      %s30 = sadd.s32 1, %s23
      %p31 = scmp.ge.s32.totalorder %s30, 2
      %s32 = scalar_select %p31, 0, %s30
      %s33 = sadd.s32 1, %s22
      %s34 = scalar_select %p31, %s33, %s22
      %p35 = scmp.ge.s32.totalorder %s34, 1
      %s36 = scalar_select %p35, 0, %s34
      %s37 = sadd.s32 1, %s21
      %s38 = scalar_select %p35, %s37, %s21
      %p39 = scmp.ge.s32.totalorder %s38, 2
      %s40 = scalar_select %p39, 0, %s38
      %s41 = ssub.s32 %s21, %s40
      %s42 = ssub.s32 %s22, %s36
      %s43 = sor.u32 %s41, %s42
      %s44 = ssub.s32 %s23, %s32
      %s45 = sor.u32 %s43, %s44
      %p46 = scmp.eq.s32.totalorder %s45, 0
      %s48 = sadd.s32 %s47, 1
      %s49 = scalar_select %p46, %s47, %s48
      %p52 = pneg %p46
      %p53 = scmp.eq.s32.totalorder %s14, 3
      %p54 = por %p52, %p53
      %p55 = scmp.ne.s32.totalorder %s47, %s50
      %p56 = scmp.eq.s32.totalorder %s14, 0
      %p57 = por %p55, %p56
      %p58 = scmp.ne.s32.totalorder %s47, %s50
      %p59 = scmp.eq.s32.totalorder %s19, 3
      %p60 = por %p58, %p59
      %p61 = scmp.ne.s32.totalorder %s50, %s51
      %p62 = scmp.eq.s32.totalorder %s19, 0
      %p63 = por %p61, %p62
      %p64 = scmp.ne.s32.totalorder %s50, %s51
      %p65 = scmp.eq.s32.totalorder %s20, 3
      %p66 = por %p64, %p65
      %p68 = scmp.ne.s32.totalorder %s51, %s67
      %p69 = scmp.eq.s32.totalorder %s20, 0
      %p70 = por %p68, %p69
      %s71 = ssub.s32 %s21, %s40
      %p72 = scmp.eq.s32.totalorder %s71, 0
      %s74 = sadd.s32 %s73, 1
      %s75 = scalar_select %p72, %s73, %s74
      %p78 = pneg %p72
      %p79 = scmp.eq.s32.totalorder %s14, 3
      %p80 = por %p78, %p79
      %p81 = scmp.ne.s32.totalorder %s73, %s76
      %p82 = scmp.eq.s32.totalorder %s14, 0
      %p83 = por %p81, %p82
      %p84 = scmp.ne.s32.totalorder %s73, %s76
      %p85 = scmp.eq.s32.totalorder %s19, 3
      %p86 = por %p84, %p85
      %p87 = scmp.ne.s32.totalorder %s76, %s77
      %p88 = scmp.eq.s32.totalorder %s19, 0
      %p89 = por %p87, %p88
      %p90 = scmp.ne.s32.totalorder %s76, %s77
      %p91 = scmp.eq.s32.totalorder %s20, 3
      %p92 = por %p90, %p91
      %p94 = scmp.ne.s32.totalorder %s77, %s93
      %p95 = scmp.eq.s32.totalorder %s20, 0
      %p96 = por %p94, %p95
      %s97 = ssub.s32 %s21, %s40
      %s98 = ssub.s32 %s22, %s36
      %s99 = sor.u32 %s97, %s98
      %p100 = scmp.eq.s32.totalorder %s99, 0
      %s102 = sadd.s32 %s101, 1
      %s103 = scalar_select %p100, %s101, %s102
      %p106 = pneg %p100
      %p107 = scmp.eq.s32.totalorder %s14, 3
      %p108 = por %p106, %p107
      %p109 = scmp.ne.s32.totalorder %s101, %s104
      %p110 = scmp.eq.s32.totalorder %s14, 0
      %p111 = por %p109, %p110
      %p112 = scmp.ne.s32.totalorder %s101, %s104
      %p113 = scmp.eq.s32.totalorder %s19, 3
      %p114 = por %p112, %p113
      %p115 = scmp.ne.s32.totalorder %s104, %s105
      %p116 = scmp.eq.s32.totalorder %s19, 0
      %p117 = por %p115, %p116
      %p118 = scmp.ne.s32.totalorder %s104, %s105
      %p119 = scmp.eq.s32.totalorder %s20, 3
      %p120 = por %p118, %p119
      %p122 = scmp.ne.s32.totalorder %s105, %s121
      %p123 = scmp.eq.s32.totalorder %s20, 0
      %p124 = por %p122, %p123
      %p125 = scmp.le.s32.totalorder 1, %s14
      %p126 = scmp.lt.s32.totalorder %s14, 5
      %p127 = pnand %p125, %p126
      %p128 = pneg %p127
      // Predicated region
      $region9: #{tpu_custom_call.1} parent=5 // pred_check
        _
      $region10: #{tpu_custom_call.1} parent=5 // pred_check_branch
        %130 = sbr.rel (%p127) target = $region12
      $region11: #{tpu_custom_call.1} parent=5 // pred_region
        %s131 = ssub.s32 %s14, 1
      $region12: #{tpu_custom_call.1} parent=5 // pred_fallthru
        _
      %p132 = scmp.lt.s32.totalorder %s14, 4
      // Predicated region
      $region13: #{tpu_custom_call.1} parent=5 // pred_check
        %p133 = pneg %p132
      $region14: #{tpu_custom_call.1} parent=5 // pred_check_branch
        %135 = sbr.rel (%p133) target = $region16
      $region15: #{tpu_custom_call.1} parent=5 // pred_region
        // Predicated region
        $region17: #{tpu_custom_call.1} parent=15 // pred_check
          %p136 = pneg %p57
        $region18: #{tpu_custom_call.1} parent=15 // pred_check_branch
          %138 = sbr.rel (%p136) target = $region20
        $region19: #{tpu_custom_call.1} parent=15 // pred_region
          %s139 = sand.u32 %s47, 1
          %s140 = scalar_lea.sflag [#allocation5], %s139
          %s141 = sand.u32 %s47, 1
          %s142 = smul.addr %s141, 4
          %s143 = scalar_lea.vmem [#allocation4], %s142
          %s145 = ssub.s32 64, 64
          %146 = vsyncadd %s140, %s145
          %s147 = smul.addr %s22, 2
          %s148 = sadd.s32 %s23, %s147
          %s149 = smul.addr %s21, 2
          %s150 = sadd.s32 %s148, %s149
          %s151 = smul.addr %s150, 64
          %s152 = scalar_lea.hbm %s0, %s151
          %s154 = sshll.u32 %s143, 4
          %s155 = int_to_ptr.vmem [resolvable:$true] %s154
          %157 = dma.hbm_to_vmem [thread:$0]  %s152, 64, %s155, %s140
        $region20: #{tpu_custom_call.1} parent=15 // pred_fallthru
          _
        // Predicated region
        $region21: #{tpu_custom_call.1} parent=15 // pred_check
          %p158 = pneg %p83
        $region22: #{tpu_custom_call.1} parent=15 // pred_check_branch
          %160 = sbr.rel (%p158) target = $region24
        $region23: #{tpu_custom_call.1} parent=15 // pred_region
          %s161 = sand.u32 %s73, 1
          %s162 = scalar_lea.sflag [#allocation7], %s161
          %s163 = sand.u32 %s73, 1
          %s164 = smul.addr %s163, 2
          %s165 = scalar_lea.vmem [#allocation6], %s164
          %s167 = ssub.s32 32, 32
          %168 = vsyncadd %s162, %s167
          %s169 = smul.addr %s21, 32
          %s170 = scalar_lea.hbm %s1, %s169
          %s172 = sshll.u32 %s165, 4
          %s173 = int_to_ptr.vmem [resolvable:$true] %s172
          %175 = dma.hbm_to_vmem [thread:$0]  %s170, 32, %s173, %s162
        $region24: #{tpu_custom_call.1} parent=15 // pred_fallthru
          _
      $region16: #{tpu_custom_call.1} parent=5 // pred_fallthru
        _
      %p176 = scmp.le.s32.totalorder 1, %s14
      %p177 = scmp.lt.s32.totalorder %s14, 5
      %p178 = pnand %p176, %p177
      %p179 = pneg %p178
      // Predicated region
      $region25: #{tpu_custom_call.1} parent=5 // pred_check
        _
      $region26: #{tpu_custom_call.1} parent=5 // pred_check_branch
        %181 = sbr.rel (%p178) target = $region28
      $region27: #{tpu_custom_call.1} parent=5 // pred_region
        %s182 = ssub.s32 %s14, 1
        %s183 = sand.u32 %s50, 1
        %s184 = scalar_lea.sflag [#allocation5], %s183
        %s185 = sand.u32 %s50, 1
        %s186 = smul.addr %s185, 4
        %s187 = scalar_lea.vmem [#allocation4], %s186
        // Predicated region
        $region29: #{tpu_custom_call.1} parent=27 // pred_check
          %p188 = pneg %p63
        $region30: #{tpu_custom_call.1} parent=27 // pred_check_branch
          %190 = sbr.rel (%p188) target = $region32
        $region31: #{tpu_custom_call.1} parent=27 // pred_region
          %191 = dma.done %s184, 64
        $region32: #{tpu_custom_call.1} parent=27 // pred_fallthru
          _
        %s192 = sand.u32 %s76, 1
        %s193 = scalar_lea.sflag [#allocation7], %s192
        %s194 = sand.u32 %s76, 1
        %s195 = smul.addr %s194, 2
        %s196 = scalar_lea.vmem [#allocation6], %s195
        // Predicated region
        $region33: #{tpu_custom_call.1} parent=27 // pred_check
          %p197 = pneg %p89
        $region34: #{tpu_custom_call.1} parent=27 // pred_check_branch
          %199 = sbr.rel (%p197) target = $region36
        $region35: #{tpu_custom_call.1} parent=27 // pred_region
          %200 = dma.done %s193, 32
        $region36: #{tpu_custom_call.1} parent=27 // pred_fallthru
          _
        %s201 = sand.u32 %s50, 1
        %s202 = scalar_lea.sflag [#allocation5], %s201
        %s203 = sand.u32 %s50, 1
        %s204 = smul.addr %s203, 4
        %s205 = scalar_lea.vmem [#allocation4], %s204
        %p206 = pneg %p63
        %p207 = pneg %p60
        %s208 = sand.u32 %s76, 1
        %s209 = scalar_lea.sflag [#allocation7], %s208
        %s210 = sand.u32 %s76, 1
        %s211 = smul.addr %s210, 2
        %s212 = scalar_lea.vmem [#allocation6], %s211
        %p213 = pneg %p89
        %p214 = pneg %p86
        %p215 = pneg %p117
        %p216 = pneg %p114
        %p217 = scmp.lt.s32.totalorder %s24, 1
        %s218 = scalar_select %p217, %s24, 1
        %p219 = scmp.lt.s32.totalorder %s25, 0
        %s220 = scalar_select %p219, %s25, 0
        %s221 = sadd.s32 %s220, %s218
        %s222 = smul.addr %s221, 4
        %s223 = scalar_lea.vmem %s2, %s222
        %p224 = scmp.lt.s32.totalorder %s24, 1
        %s225 = scalar_select %p224, %s24, 1
        %p226 = scmp.lt.s32.totalorder %s25, 0
        %s227 = scalar_select %p226, %s25, 0
        %s228 = sadd.s32 %s227, %s225
        %s229 = smul.addr %s228, 4
        %s230 = scalar_lea.vmem %s2, %s229
        %p231 = scmp.eq.s32.totalorder %s26, 0
        // Predicated region
        $region37: #{tpu_custom_call.1} parent=27 // pred_check
          %p232 = pneg %p231
        $region38: #{tpu_custom_call.1} parent=27 // pred_check_branch
          %234 = sbr.rel (%p232) target = $region40
        $region39: #{tpu_custom_call.1} parent=27 // pred_region
          %vm235 = vcmask 3072
          %236 = vst.msk [vmem:[#allocation2] sm:$0xf] %vm235, 0.0
          %vm237 = vcmask 0
          %238 = vst.msk [vmem:[#allocation3] sm:$0x1] %vm237, 0.0
        $region40: #{tpu_custom_call.1} parent=27 // pred_fallthru
          _
        %s239 = scalar_lea.vmem %s196, %s26 [#allocation6]
        %v240 = vld [vmem:[%s239] sm:$0x1]
        %v241 = vld [vmem:[#allocation3] sm:$0x1]
        %vm242 = vcmask 1040384
        %v243 = vsel %vm242, %v240, 0.0
        %244 = vadd.xlane.f32.xlu0 %v243
        %v245 = vpop.xlane.xlu0 %244
        %v246 = vadd.f32 %v241, %v245
        %vm247 = vcmask 0
        %248 = vst.msk [vmem:[#allocation3] sm:$0x1] %vm247, %v246
        %v249 = vld [vmem:[%s187] sm:$0xf]
        %v250 = vld [vmem:[#allocation2] sm:$0xf]
        %v251 = vlaneseq
        %v252 = vshrl.u32 %v251, 7
        %v253 = vsub.s32 0, %v252
        %v254 = vrot.slane %v240, %v253
        %v255 = vmul.f32 %v249, %v254
        %vm256 = vcmask 1043456
        %v257 = vsel %vm256, %v255, 0.0
        %258 = vadd.xlane.f32.xlu0 %v257
        %v259 = vpop.xlane.xlu0 %258
        %v260 = vadd.f32 %v250, %v259
        %vm261 = vcmask 3072
        %262 = vst.msk [vmem:[#allocation2] sm:$0xf] %vm261, %v260
        %p263 = scmp.eq.s32.totalorder %s26, 1
        // Predicated region
        $region41: #{tpu_custom_call.1} parent=27 // pred_check
          %p264 = pneg %p263
        $region42: #{tpu_custom_call.1} parent=27 // pred_check_branch
          %266 = sbr.rel (%p264) target = $region44
        $region43: #{tpu_custom_call.1} parent=27 // pred_region
          %v267 = vld [vmem:[#allocation2] sm:$0xf]
          %v268 = vld [vmem:[#allocation3] sm:$0x1]
          %v269 = vadd.f32 %v268, 0.001
          %v271 = vlaneseq
          %v272 = vshrl.u32 %v271, 7
          %v273 = vsub.s32 0, %v272
          %v274 = vrot.slane %v269, %v273
          %v276 = vrcp.pop %v274
          %v277 = vmul.f32 %v267, %v276
          %278 = vst.msk [vmem:[%s230] sm:$0xf] %vm261, %v277
        $region44: #{tpu_custom_call.1} parent=27 // pred_fallthru
          _
        %p279 = scmp.lt.s32.totalorder %s24, 1
        %s280 = scalar_select %p279, %s24, 1
        %p281 = scmp.lt.s32.totalorder %s25, 0
        %s282 = scalar_select %p281, %s25, 0
        %s283 = sadd.s32 %s282, %s280
        %s284 = smul.addr %s283, 4
        %s285 = scalar_lea.vmem %s2, %s284
        // Predicated region
        $region45: #{tpu_custom_call.1} parent=27 // pred_check
          %p286 = pneg %p114
        $region46: #{tpu_custom_call.1} parent=27 // pred_check_branch
          %288 = sbr.rel (%p286) target = $region48
        $region47: #{tpu_custom_call.1} parent=27 // pred_region
          _
        $region48: #{tpu_custom_call.1} parent=27 // pred_fallthru
          _
      $region28: #{tpu_custom_call.1} parent=5 // pred_fallthru
        _
      %p289 = scmp.le.s32.totalorder 2, %s14
      // Predicated region
      $region49: #{tpu_custom_call.1} parent=5 // pred_check
        %p290 = pneg %p289
      $region50: #{tpu_custom_call.1} parent=5 // pred_check_branch
        %292 = sbr.rel (%p290) target = $region52
      $region51: #{tpu_custom_call.1} parent=5 // pred_region
        %s293 = ssub.s32 %s14, 2
        // Predicated region
        $region53: #{tpu_custom_call.1} parent=51 // pred_check
          %p294 = pneg %p120
        $region54: #{tpu_custom_call.1} parent=51 // pred_check_branch
          %296 = sbr.rel (%p294) target = $region56
        $region55: #{tpu_custom_call.1} parent=51 // pred_region
          %p297 = scmp.lt.s32.totalorder %s27, 1
          %s298 = scalar_select %p297, %s27, 1
          %p299 = scmp.lt.s32.totalorder %s28, 0
          %s300 = scalar_select %p299, %s28, 0
          %s301 = sadd.s32 %s300, %s298
          %s302 = smul.addr %s301, 4
          %s303 = scalar_lea.vmem %s2, %s302
        $region56: #{tpu_custom_call.1} parent=51 // pred_fallthru
          _
      $region52: #{tpu_custom_call.1} parent=5 // pred_fallthru
        _
    $region6: #{tpu_custom_call.1} parent=1 // loop_footer
      %s18 = sadd.s32 1, %s14
    $region7: #{tpu_custom_call.1} parent=1 // loop_footer_branch
      %13 = sbr.rel target = $region3
    $region8: #{tpu_custom_call.1} parent=1 // loop_exit
      _
    %304 = vsyncpa [#allocation5], 1
    %s305 = scalar_lea.sflag [#allocation5], 1
    %306 = vsyncpa %s305, 1
    %307 = vsyncpa [#allocation7], 1
    %s308 = scalar_lea.sflag [#allocation7], 1
    %309 = vsyncpa %s308, 1

</llo_original>
